<compile_context>
chip_gen: v7x
topology: tpu7x:2x2x1
jax: 0.10.0
libtpu: 0.0.40
codegen_flags: <defaults>
</compile_context>

<pallas_src>
import jax
import jax.numpy as jnp
from jax.experimental import pallas as pl
from jax.experimental.pallas import tpu as pltpu


def _round_up(x, m):
    return ((x + m - 1) // m) * m


def _cdiv(a, b):
    return (a + b - 1) // b


def _vmem_capacity_bytes():
    """Physical VMEM per core; fall back to the smallest (v7x, 64 MiB)."""
    try:
        info = pltpu.get_tpu_info()
        cap = getattr(info, "vmem_capacity_bytes", None)
        if cap:
            return int(cap)
    except Exception:
        pass
    return 64 * 1024 * 1024


def _resident_spec(shape):
    """BlockSpec for a weight/bias whose block never changes across the grid.

    Constant index_map => one VMEM buffer suffices (Buffered(1)); this halves
    the resident-weight VMEM footprint vs. the default double buffering.
    Falls back to a plain BlockSpec if the pipeline_mode kwarg is unavailable.
    """
    idx = lambda i: (0,) * len(shape)
    try:
        return pl.BlockSpec(shape, idx, pipeline_mode=pl.Buffered(1))
    except (AttributeError, TypeError):
        return pl.BlockSpec(shape, idx)


def msvae_encoder_kernel(x_ref, wh_ref, bh_ref, whd_ref, bhd_ref, out_ref):
    """One batch tile: h = relu(x @ Wh + bh); out = h @ [Wm|Wv] + [bm|bv]."""
    # Cast x (f32 in HBM/VMEM) to the matmul dtype on the VPU; both matmuls run
    # on the MXU with f32 accumulation.
    x = x_ref[...].astype(wh_ref.dtype)
    h = jnp.dot(x, wh_ref[...], preferred_element_type=jnp.float32)
    # Bias-add in f32, then downcast and apply ReLU in the compute dtype
    # (bit-identical to f32 ReLU followed by downcast; cheaper on v6e/v7x).
    h = jnp.maximum((h + bh_ref[...]).astype(whd_ref.dtype), 0)
    # Fused mean|logvar head: one lane-dense matmul + one wide unmasked store.
    out = jnp.dot(h, whd_ref[...], preferred_element_type=jnp.float32)
    out_ref[...] = (out + bhd_ref[...]).astype(out_ref.dtype)


def prepare_msvae_params(params, *, compute_dtype=jnp.bfloat16):
    """One-time parameter prep: fuse the mean/logvar heads into one lane-dense
    weight, zero-pad feature dims to multiples of 128 and cast to the matmul
    dtype.  Call once; per-forward only x moves through the wrapper."""
    wh = params["wh"]
    bh = params["bh"].reshape(1, -1)
    wm, bm = params["wm"], params["bm"].reshape(1, -1)
    wv, bv = params["wv"], params["bv"].reshape(1, -1)

    d_in, hidden = wh.shape
    latent = wm.shape[1]

    w_heads = jnp.concatenate([wm, wv], axis=1)          # [H, 2L]
    b_heads = jnp.concatenate([bm, bv], axis=1)          # [1, 2L]

    d_pad = _round_up(d_in, 128)
    h_pad = _round_up(hidden, 128)
    o_pad = _round_up(2 * latent, 128)

    return {
        "whp": jnp.pad(wh, ((0, d_pad - d_in),
                            (0, h_pad - hidden))).astype(compute_dtype),
        "bhp": jnp.pad(bh, ((0, 0), (0, h_pad - hidden))).astype(jnp.float32),
        "whd": jnp.pad(w_heads, ((0, h_pad - hidden),
                                 (0, o_pad - 2 * latent))).astype(compute_dtype),
        "bhd": jnp.pad(b_heads, ((0, 0),
                                 (0, o_pad - 2 * latent))).astype(jnp.float32),
        "d_in": d_in, "hidden": hidden, "latent": latent,
        "d_pad": d_pad, "h_pad": h_pad, "o_pad": o_pad,
    }


def msvae_encoder(x, prepped, *, block_m=None, out_dtype=jnp.float32):
    """Pallas forward for MSVAEEncoder.  x: [B, input_dim] float32."""
    whp, bhp = prepped["whp"], prepped["bhp"]
    whd, bhd = prepped["whd"], prepped["bhd"]
    d_in, latent = prepped["d_in"], prepped["latent"]
    d_pad, h_pad, o_pad = prepped["d_pad"], prepped["h_pad"], prepped["o_pad"]

    B = x.shape[0]
    assert x.shape[1] == d_in, "input feature dim mismatch"

    cap = _vmem_capacity_bytes()
    if block_m is None:
        # Bigger batch tiles on 128 MiB chips (v5e/v6e); 256 on v7x (64 MiB).
        block_m = 512 if cap >= 96 * 1024 * 1024 else 256
    block_m = _round_up(block_m, 16)                     # keep bf16 (16,128) tiling legal

    # Pad the batch to 16 first, then pick tm so pad waste stays small and the
    # grid has >= 2 steps when possible (lets v7x shard across its 2 TCs).
    b16 = _round_up(B, 16)
    n_tiles = _cdiv(b16, block_m)
    if b16 >= 32:
        n_tiles = max(n_tiles, 2)
    tm = _round_up(_cdiv(b16, n_tiles), 16)
    b_pad = _round_up(b16, tm)
    grid = (b_pad // tm,)

    # x stays f32 here (cast to the compute dtype inside the kernel); zero-pad
    # only if needed.  Zero padding is exact for Linear + ReLU.
    if b_pad != B or d_pad != d_in:
        xp = jnp.pad(x, ((0, b_pad - B), (0, d_pad - d_in)))
    else:
        xp = x

    w_itemsize = jnp.dtype(whp.dtype).itemsize
    x_itemsize = jnp.dtype(xp.dtype).itemsize
    out_itemsize = jnp.dtype(out_dtype).itemsize

    # Advisory cost estimate so XLA schedules the custom call sensibly.
    flops = 2 * b_pad * (d_pad * h_pad + h_pad * o_pad)
    bytes_accessed = (xp.size * x_itemsize
                      + (whp.size + whd.size) * w_itemsize
                      + (bhp.size + bhd.size) * 4
                      + b_pad * o_pad * out_itemsize)
    cost = pl.CostEstimate(flops=int(flops), transcendentals=0,
                           bytes_accessed=int(bytes_accessed))

    # VMEM budget: single-buffered resident weights + double-buffered x / out
    # tiles + hidden activations, capped at ~85% of the chip's physical VMEM.
    est_vmem = ((whp.size + whd.size) * w_itemsize
                + (bhp.size + bhd.size) * 4
                + 2 * tm * d_pad * x_itemsize
                + 2 * tm * o_pad * out_itemsize
                + tm * h_pad * (4 + w_itemsize))
    vmem_limit = int(min(0.85 * cap, max(2 * est_vmem, 32 * 1024 * 1024)))

    out = pl.pallas_call(
        msvae_encoder_kernel,
        out_shape=jax.ShapeDtypeStruct((b_pad, o_pad), out_dtype),
        grid=grid,
        in_specs=[
            pl.BlockSpec((tm, d_pad), lambda i: (i, 0)),  # x batch tile (pipelined)
            _resident_spec((d_pad, h_pad)),               # W_h        (resident, 1 buf)
            _resident_spec((1, h_pad)),                   # b_h        (resident, 1 buf)
            _resident_spec((h_pad, o_pad)),               # [W_m|W_v]  (resident, 1 buf)
            _resident_spec((1, o_pad)),                   # [b_m|b_v]  (resident, 1 buf)
        ],
        out_specs=pl.BlockSpec((tm, o_pad), lambda i: (i, 0)),
        compiler_params=pltpu.CompilerParams(
            dimension_semantics=("parallel",),
            vmem_limit_bytes=vmem_limit),
        cost_estimate=cost,
    )(xp, whp, bhp, whd, bhd)

    out = out[:B]
    return out[:, :latent], out[:, latent:2 * latent]


def init_params(key, input_dim, hidden_dim, latent_dim):
    """Deterministic synthetic parameters (shapes match the PyTorch module)."""
    keys = jax.random.split(key, 6)
    scale_in = 1.0 / jnp.sqrt(input_dim)
    scale_h = 1.0 / jnp.sqrt(hidden_dim)
    return {
        # stored as [in, out] (transpose of nn.Linear.weight)
        "wh": jax.random.uniform(keys[0], (input_dim, hidden_dim), jnp.float32,
                                 -scale_in, scale_in),
        "bh": jax.random.uniform(keys[1], (1, hidden_dim), jnp.float32,
                                 -scale_in, scale_in),
        "wm": jax.random.uniform(keys[2], (hidden_dim, latent_dim), jnp.float32,
                                 -scale_h, scale_h),
        "bm": jax.random.uniform(keys[3], (1, latent_dim), jnp.float32,
                                 -scale_h, scale_h),
        "wv": jax.random.uniform(keys[4], (hidden_dim, latent_dim), jnp.float32,
                                 -scale_h, scale_h),
        "bv": jax.random.uniform(keys[5], (1, latent_dim), jnp.float32,
                                 -scale_h, scale_h),
    }


if __name__ == "__main__":
    # Small shapes consistent with the module: x is [batch, input_dim].
    B, input_dim, hidden_dim, latent_dim = 8, 16, 32, 8

    key = jax.random.PRNGKey(0)
    k_x, k_p = jax.random.split(key)
    x = jax.random.normal(k_x, (B, input_dim), jnp.float32)
    params = init_params(k_p, input_dim, hidden_dim, latent_dim)

    # One-time parameter prep (fused heads, padded, cast) per precision.
    prepped_bf16 = prepare_msvae_params(params, compute_dtype=jnp.bfloat16)
    prepped_f32 = prepare_msvae_params(params, compute_dtype=jnp.float32)

    mean, logvar = msvae_encoder(x, prepped_bf16)            # bf16 MXU path
    mean32, logvar32 = msvae_encoder(x, prepped_f32)          # f32 path (tight check)
    jax.block_until_ready((mean, logvar, mean32, logvar32))

    # Pure-JAX f32 reference.
    h_ref = jnp.maximum(x @ params["wh"] + params["bh"], 0.0)
    mean_ref = h_ref @ params["wm"] + params["bm"]
    logvar_ref = h_ref @ params["wv"] + params["bv"]
    assert jnp.allclose(mean32, mean_ref, atol=1e-5, rtol=1e-5)
    assert jnp.allclose(logvar32, logvar_ref, atol=1e-5, rtol=1e-5)

    # bf16-matched reference (same cast points as the kernel).
    xb = x.astype(jnp.bfloat16)
    hb = jnp.maximum(
        jnp.dot(xb, params["wh"].astype(jnp.bfloat16),
                preferred_element_type=jnp.float32) + params["bh"], 0.0)
    hbb = hb.astype(jnp.bfloat16)
    mean_b = jnp.dot(hbb, params["wm"].astype(jnp.bfloat16),
                     preferred_element_type=jnp.float32) + params["bm"]
    logvar_b = jnp.dot(hbb, params["wv"].astype(jnp.bfloat16),
                       preferred_element_type=jnp.float32) + params["bv"]
    assert jnp.allclose(mean, mean_b, atol=1e-3, rtol=1e-3)
    assert jnp.allclose(logvar, logvar_b, atol=1e-3, rtol=1e-3)

    assert mean.shape == (B, latent_dim) and logvar.shape == (B, latent_dim)
    print("KERNEL_OK")
</pallas_src>

<mosaic_0001>
module attributes {stable_mosaic.version = 11 : i64} {
  func.func @msvae_encoder_kernel(%arg0: i32, %arg1: memref<16x128xf32, #tpu.memory_space<vmem>>, %arg2: memref<128x128xbf16, #tpu.memory_space<vmem>>, %arg3: memref<1x128xf32, #tpu.memory_space<vmem>>, %arg4: memref<128x128xbf16, #tpu.memory_space<vmem>>, %arg5: memref<1x128xf32, #tpu.memory_space<vmem>>, %arg6: memref<16x128xf32, #tpu.memory_space<vmem>>) attributes {dimension_semantics = [#tpu.dimension_semantics<parallel>], iteration_bounds = array<i64: 1>, scalar_prefetch = 0 : i64, scratch_operands = 0 : i64, tpu.core_type = #tpu.core_type<tc>, window_params = [{transform_indices = @transform_0, window_bounds = array<i64: 16, 128>}, {pipeline_mode = #tpu.pipeline_mode<synchronous>, transform_indices = @transform_1, window_bounds = array<i64: 128, 128>}, {pipeline_mode = #tpu.pipeline_mode<synchronous>, transform_indices = @transform_2, window_bounds = array<i64: 1, 128>}, {pipeline_mode = #tpu.pipeline_mode<synchronous>, transform_indices = @transform_3, window_bounds = array<i64: 128, 128>}, {pipeline_mode = #tpu.pipeline_mode<synchronous>, transform_indices = @transform_4, window_bounds = array<i64: 1, 128>}, {transform_indices = @transform_5, window_bounds = array<i64: 16, 128>}]} {
    %c0 = arith.constant 0 : index
    %c0_0 = arith.constant 0 : index
    %0 = vector.load %arg1[%c0, %c0_0] : memref<16x128xf32, #tpu.memory_space<vmem>>, vector<16x128xf32>
    %1 = arith.truncf %0 : vector<16x128xf32> to vector<16x128xbf16>
    %c0_1 = arith.constant 0 : index
    %c0_2 = arith.constant 0 : index
    %2 = vector.load %arg2[%c0_1, %c0_2] : memref<128x128xbf16, #tpu.memory_space<vmem>>, vector<128x128xbf16>
    %cst = arith.constant dense<0.000000e+00> : vector<16x128xf32>
    %3 = tpu.matmul %1, %2, %cst {dimension_numbers = #tpu.dot_dimension_numbers<[1], [0], [0], [1], [0, 0, 1, 1], [], []>} : vector<16x128xbf16>, vector<128x128xbf16>, vector<16x128xf32> -> vector<16x128xf32>
    %c0_3 = arith.constant 0 : index
    %c0_4 = arith.constant 0 : index
    %4 = vector.load %arg3[%c0_3, %c0_4] : memref<1x128xf32, #tpu.memory_space<vmem>>, vector<1x128xf32>
    %5 = vector.broadcast %4 : vector<1x128xf32> to vector<16x128xf32>
    %6 = arith.addf %3, %5 : vector<16x128xf32>
    %7 = arith.truncf %6 : vector<16x128xf32> to vector<16x128xbf16>
    %cst_5 = arith.constant 0.000000e+00 : bf16
    %8 = vector.broadcast %cst_5 : bf16 to vector<16x128xbf16>
    %9 = arith.maximumf %7, %8 : vector<16x128xbf16>
    %c0_6 = arith.constant 0 : index
    %c0_7 = arith.constant 0 : index
    %10 = vector.load %arg4[%c0_6, %c0_7] : memref<128x128xbf16, #tpu.memory_space<vmem>>, vector<128x128xbf16>
    %cst_8 = arith.constant dense<0.000000e+00> : vector<16x128xf32>
    %11 = tpu.matmul %9, %10, %cst_8 {dimension_numbers = #tpu.dot_dimension_numbers<[1], [0], [0], [1], [0, 0, 1, 1], [], []>} : vector<16x128xbf16>, vector<128x128xbf16>, vector<16x128xf32> -> vector<16x128xf32>
    %c0_9 = arith.constant 0 : index
    %c0_10 = arith.constant 0 : index
    %12 = vector.load %arg5[%c0_9, %c0_10] : memref<1x128xf32, #tpu.memory_space<vmem>>, vector<1x128xf32>
    %13 = vector.broadcast %12 : vector<1x128xf32> to vector<16x128xf32>
    %14 = arith.addf %11, %13 : vector<16x128xf32>
    %c0_11 = arith.constant 0 : index
    %c0_12 = arith.constant 0 : index
    %15 = vector.load %arg6[%c0_11, %c0_12] : memref<16x128xf32, #tpu.memory_space<vmem>>, vector<16x128xf32>
    tpu.vector_store %arg6[%c0_11, %c0_12], %14 {strides = array<i32>} : memref<16x128xf32, #tpu.memory_space<vmem>>, vector<16x128xf32>,
    return
  }
  func.func @transform_0(%arg0: i32) -> (i32, i32) {
    %c0_i32 = arith.constant 0 : i32
    %c0_i32_0 = arith.constant 0 : i32
    return %arg0, %c0_i32 : i32, i32
  }
  func.func @transform_1(%arg0: i32) -> (i32, i32) {
    %c0_i32 = arith.constant 0 : i32
    %c0_i32_0 = arith.constant 0 : i32
    %c0_i32_1 = arith.constant 0 : i32
    return %c0_i32, %c0_i32_0 : i32, i32
  }
  func.func @transform_2(%arg0: i32) -> (i32, i32) {
    %c0_i32 = arith.constant 0 : i32
    %c0_i32_0 = arith.constant 0 : i32
    %c0_i32_1 = arith.constant 0 : i32
    return %c0_i32, %c0_i32_0 : i32, i32
  }
  func.func @transform_3(%arg0: i32) -> (i32, i32) {
    %c0_i32 = arith.constant 0 : i32
    %c0_i32_0 = arith.constant 0 : i32
    %c0_i32_1 = arith.constant 0 : i32
    return %c0_i32, %c0_i32_0 : i32, i32
  }
  func.func @transform_4(%arg0: i32) -> (i32, i32) {
    %c0_i32 = arith.constant 0 : i32
    %c0_i32_0 = arith.constant 0 : i32
    %c0_i32_1 = arith.constant 0 : i32
    return %c0_i32, %c0_i32_0 : i32, i32
  }
  func.func @transform_5(%arg0: i32) -> (i32, i32) {
    %c0_i32 = arith.constant 0 : i32
    %c0_i32_0 = arith.constant 0 : i32
    return %arg0, %c0_i32 : i32, i32
  }
}

</mosaic_0001>

<llo_original>
// kernel: tpu_custom_call.1
$region0: #{tpu_custom_call.1}
  #allocation0 [shape = 'u32[]', space=smem, size = 0x4, offset = 0x4, fixed_abs, tag = 'smem constant byte address 0x4 - core index']
  #allocation1 [shape = 'u32[144,128]{1,0:T(1,128)}', space=vmem, size = 0x12000, scoped, tag = 'internal scratch']
  %s0 = inlined_call_operand.hbm [shape: f32[16,128], index: 0, kind: input, shape index: {}]
  %s1 = inlined_call_operand.hbm [shape: bf16[128,128], index: 1, kind: input, shape index: {}]
  %s2 = inlined_call_operand.vmem [shape: f32[1,128], index: 2, kind: input, shape index: {}]
  %s3 = inlined_call_operand.hbm [shape: bf16[128,128], index: 3, kind: input, shape index: {}]
  %s4 = inlined_call_operand.vmem [shape: f32[1,128], index: 4, kind: input, shape index: {}]
  %s5 = inlined_call_operand.hbm [shape: f32[16,128], index: 5, kind: output, shape index: {}]
  %s6 = sld [smem:[#allocation0]]
  $region42: #{tpu_custom_call.1} parent=0
    _
  %s8 = ssub.s32 1, %s6
  %s9 = scalar_select 0, %s8, %s6
  $region1: #{tpu_custom_call.1} parent=0
    #allocation2 [shape = 'u8[8192]{0}', space=vmem, size = 0x2000, scoped, tag = 'input window, operand 0, single buffered']
    #allocation3 [shape = 's32[1]{0}', space=sflag, size = 0x4, scoped, tag = 'scoped memory for tpu_custom_call.1']
    #allocation4 [shape = 's32[1]{0}', space=sflag, size = 0x4, scoped, tag = 'scoped memory for tpu_custom_call.1']
    #allocation5 [shape = 'u8[32768]{0}', space=vmem, size = 0x8000, scoped, tag = 'input window, operand 1, single buffered']
    #allocation6 [shape = 's32[1]{0}', space=sflag, size = 0x4, scoped, tag = 'scoped memory for tpu_custom_call.1']
    #allocation7 [shape = 'u8[32768]{0}', space=vmem, size = 0x8000, scoped, tag = 'input window, operand 3, single buffered']
    #allocation8 [shape = 'u8[8192]{0}', space=vmem, size = 0x2000, scoped, tag = 'output window, operand 0, single buffered']
    %10 = vsyncpa [#allocation3], 0
    %11 = vsyncpa [#allocation6], 0
    %12 = vsyncpa [#allocation4], 0
    // Predicated region
    $region2: #{tpu_custom_call.1} parent=1 // pred_check
      _
    $region3: #{tpu_custom_call.1} parent=1 // pred_check_branch
      %14 = sbr.rel (0) target = $region5
    $region4: #{tpu_custom_call.1} parent=1 // pred_region
      %s16 = ssub.s32 256, 256
      %17 = vsyncadd [#allocation3], %s16
      %s18 = sshll.u32 [#allocation2], 4
      %s19 = int_to_ptr.vmem [resolvable:$true] %s18
      %24 = dma.hbm_to_vmem [thread:$0]  %s0, 256, %s19, [#allocation3], 128, 128, 8
    $region5: #{tpu_custom_call.1} parent=1 // pred_fallthru
      _
    // Predicated region
    $region6: #{tpu_custom_call.1} parent=1 // pred_check
      _
    $region7: #{tpu_custom_call.1} parent=1 // pred_check_branch
      %26 = sbr.rel (0) target = $region9
    $region8: #{tpu_custom_call.1} parent=1 // pred_region
      %s28 = ssub.s32 1024, 1024
      %29 = vsyncadd [#allocation6], %s28
      %s30 = sshll.u32 [#allocation5], 4
      %s31 = int_to_ptr.vmem [resolvable:$true] %s30
      %36 = dma.hbm_to_vmem [thread:$0]  %s1, 1024, %s31, [#allocation6], 64, 64, 4
    $region9: #{tpu_custom_call.1} parent=1 // pred_fallthru
      _
    // Predicated region
    $region10: #{tpu_custom_call.1} parent=1 // pred_check
      _
    $region11: #{tpu_custom_call.1} parent=1 // pred_check_branch
      %38 = sbr.rel (0) target = $region13
    $region12: #{tpu_custom_call.1} parent=1 // pred_region
      _
    $region13: #{tpu_custom_call.1} parent=1 // pred_fallthru
      _
    // Predicated region
    $region14: #{tpu_custom_call.1} parent=1 // pred_check
      _
    $region15: #{tpu_custom_call.1} parent=1 // pred_check_branch
      %40 = sbr.rel (0) target = $region17
    $region16: #{tpu_custom_call.1} parent=1 // pred_region
      %s42 = ssub.s32 1024, 1024
      %43 = vsyncadd [#allocation6], %s42
      %s44 = sshll.u32 [#allocation7], 4
      %s45 = int_to_ptr.vmem [resolvable:$true] %s44
      %50 = dma.hbm_to_vmem [thread:$0]  %s3, 1024, %s45, [#allocation6], 64, 64, 4
    $region17: #{tpu_custom_call.1} parent=1 // pred_fallthru
      _
    // Predicated region
    $region18: #{tpu_custom_call.1} parent=1 // pred_check
      _
    $region19: #{tpu_custom_call.1} parent=1 // pred_check_branch
      %52 = sbr.rel (0) target = $region21
    $region20: #{tpu_custom_call.1} parent=1 // pred_region
      _
    $region21: #{tpu_custom_call.1} parent=1 // pred_fallthru
      _
    // Predicated region
    $region22: #{tpu_custom_call.1} parent=1 // pred_check
      _
    $region23: #{tpu_custom_call.1} parent=1 // pred_check_branch
      %54 = sbr.rel (0) target = $region25
    $region24: #{tpu_custom_call.1} parent=1 // pred_region
      %55 = dma.done [#allocation3], 256
    $region25: #{tpu_custom_call.1} parent=1 // pred_fallthru
      _
    // Predicated region
    $region26: #{tpu_custom_call.1} parent=1 // pred_check
      _
    $region27: #{tpu_custom_call.1} parent=1 // pred_check_branch
      %57 = sbr.rel (0) target = $region29
    $region28: #{tpu_custom_call.1} parent=1 // pred_region
      %58 = dma.done [#allocation6], 1024
    $region29: #{tpu_custom_call.1} parent=1 // pred_fallthru
      _
    // Predicated region
    $region30: #{tpu_custom_call.1} parent=1 // pred_check
      _
    $region31: #{tpu_custom_call.1} parent=1 // pred_check_branch
      %60 = sbr.rel (0) target = $region33
    $region32: #{tpu_custom_call.1} parent=1 // pred_region
      %61 = dma.done [#allocation6], 1024
    $region33: #{tpu_custom_call.1} parent=1 // pred_fallthru
      _
    %v63 = vld [vmem:[#allocation2] sm:$0xff]
    %v64 = vld [vmem:[#allocation2 + $0x8] sm:$0xff]
    %v65 = vpack.c.bf16 %v64, %v63
    %v66 = vld [vmem:[#allocation5] sm:$0xf]
    %v67 = vld [vmem:[#allocation5 + $0x4] sm:$0xf]
    %v68 = vld [vmem:[#allocation5 + $0x8] sm:$0xf]
    %v69 = vld [vmem:[#allocation5 + $0xc] sm:$0xf]
    %v70 = vld [vmem:[#allocation5 + $0x10] sm:$0xf]
    %v71 = vld [vmem:[#allocation5 + $0x14] sm:$0xf]
    %v72 = vld [vmem:[#allocation5 + $0x18] sm:$0xf]
    %v73 = vld [vmem:[#allocation5 + $0x1c] sm:$0xf]
    %v74 = vld [vmem:[#allocation5 + $0x20] sm:$0xf]
    %v75 = vld [vmem:[#allocation5 + $0x24] sm:$0xf]
    %v76 = vld [vmem:[#allocation5 + $0x28] sm:$0xf]
    %v77 = vld [vmem:[#allocation5 + $0x2c] sm:$0xf]
    %v78 = vld [vmem:[#allocation5 + $0x30] sm:$0xf]
    %v79 = vld [vmem:[#allocation5 + $0x34] sm:$0xf]
    %v80 = vld [vmem:[#allocation5 + $0x38] sm:$0xf]
    %v81 = vld [vmem:[#allocation5 + $0x3c] sm:$0xf]
    %v82 = vld [vmem:[%s2] sm:$0x1]
    %v84 = vlaneseq
    %v85 = vshrl.u32 %v84, 7
    %v86 = vsub.s32 0, %v85
    %v87 = vrot.slane %v82, %v86
    %v105 = vunpack.c.l.b16 %v66
    %v106 = vunpack.c.l.b16 %v67
    %v107 = vunpack.c.l.b16 %v68
    %v108 = vunpack.c.l.b16 %v69
    %v109 = vunpack.c.l.b16 %v70
    %v110 = vunpack.c.l.b16 %v71
    %v111 = vunpack.c.l.b16 %v72
    %v112 = vunpack.c.l.b16 %v73
    %v113 = vunpack.c.l.b16 %v74
    %v114 = vunpack.c.l.b16 %v75
    %v115 = vunpack.c.l.b16 %v76
    %v116 = vunpack.c.l.b16 %v77
    %v117 = vunpack.c.l.b16 %v78
    %v118 = vunpack.c.l.b16 %v79
    %v119 = vunpack.c.l.b16 %v80
    %v120 = vunpack.c.l.b16 %v81
    %v121 = vpack.c.b16 %v106, %v105
    %v122 = vpack.c.b16 %v108, %v107
    %v123 = vpack.c.b16 %v110, %v109
    %v124 = vpack.c.b16 %v112, %v111
    %v125 = vpack.c.b16 %v114, %v113
    %v126 = vpack.c.b16 %v116, %v115
    %v127 = vpack.c.b16 %v118, %v117
    %v128 = vpack.c.b16 %v120, %v119
    %137 = vmatprep.subr.bf16.mxu0 0
    %138 = vmatpush1.bf16.msra.mxu0 %v121
    %139 = vmatprep.subr.bf16.mxu0 0
    %140 = vmatpush1.bf16.msra.mxu0 %v122
    %141 = vmatprep.subr.bf16.mxu0 0
    %142 = vmatpush1.bf16.msra.mxu0 %v123
    %143 = vmatprep.subr.bf16.mxu0 0
    %144 = vmatpush1.bf16.msra.mxu0 %v124
    %145 = vmatprep.subr.bf16.mxu0 0
    %146 = vmatpush1.bf16.msra.mxu0 %v125
    %147 = vmatprep.subr.bf16.mxu0 0
    %148 = vmatpush1.bf16.msra.mxu0 %v126
    %149 = vmatprep.subr.bf16.mxu0 0
    %150 = vmatpush1.bf16.msra.mxu0 %v127
    %151 = vmatprep.subr.bf16.mxu0 0
    %152 = vmatpush1.bf16.msra.mxu0 %v128
    %153 = vmatprep.subr.bf16.mxu0 0
    %154 = vmatpush1.bf16.msra.mxu0 0
    %155 = vmatprep.subr.bf16.mxu0 0
    %156 = vmatpush1.bf16.msra.mxu0 0
    %157 = vmatprep.subr.bf16.mxu0 0
    %158 = vmatpush1.bf16.msra.mxu0 0
    %159 = vmatprep.subr.bf16.mxu0 0
    %160 = vmatpush1.bf16.msra.mxu0 0
    %161 = vmatprep.subr.bf16.mxu0 0
    %162 = vmatpush1.bf16.msra.mxu0 0
    %163 = vmatprep.subr.bf16.mxu0 0
    %164 = vmatpush1.bf16.msra.mxu0 0
    %165 = vmatprep.subr.bf16.mxu0 0
    %166 = vmatpush1.bf16.msra.mxu0 0
    %167 = vmatprep.subr.bf16.mxu0 0
    %168 = vmatpush1.bf16.msra.mxu0 0
    %169 = vmatprep.mubr.bf16.mxu0 0
    %170 = vmatmul.mubr.bf16.gmra.mrb[0].mxu0 %v65
    %v171 = vpop.f32.mrb[0].mxu0
    %v172 = vadd.f32 %v87, %v171
    %v173 = vpop.f32.mrb[0].mxu0
    %v174 = vpop.f32.mrb[0].mxu0
    %v175 = vadd.f32 %v87, %v174
    %v176 = vpop.f32.mrb[0].mxu0
    %177 = vdwg.mxu0
    %v178 = vpack.c.bf16 %v175, %v172
    %v179 = vmax.bf16 %v178, 0
    %v180 = vld [vmem:[#allocation7] sm:$0xf]
    %v181 = vld [vmem:[#allocation7 + $0x4] sm:$0xf]
    %v182 = vld [vmem:[#allocation7 + $0x8] sm:$0xf]
    %v183 = vld [vmem:[#allocation7 + $0xc] sm:$0xf]
    %v184 = vld [vmem:[#allocation7 + $0x10] sm:$0xf]
    %v185 = vld [vmem:[#allocation7 + $0x14] sm:$0xf]
    %v186 = vld [vmem:[#allocation7 + $0x18] sm:$0xf]
    %v187 = vld [vmem:[#allocation7 + $0x1c] sm:$0xf]
    %v188 = vld [vmem:[#allocation7 + $0x20] sm:$0xf]
    %v189 = vld [vmem:[#allocation7 + $0x24] sm:$0xf]
    %v190 = vld [vmem:[#allocation7 + $0x28] sm:$0xf]
    %v191 = vld [vmem:[#allocation7 + $0x2c] sm:$0xf]
    %v192 = vld [vmem:[#allocation7 + $0x30] sm:$0xf]
    %v193 = vld [vmem:[#allocation7 + $0x34] sm:$0xf]
    %v194 = vld [vmem:[#allocation7 + $0x38] sm:$0xf]
    %v195 = vld [vmem:[#allocation7 + $0x3c] sm:$0xf]
    %v196 = vld [vmem:[%s4] sm:$0x1]
    %v198 = vlaneseq
    %v199 = vshrl.u32 %v198, 7
    %v200 = vsub.s32 0, %v199
    %v201 = vrot.slane %v196, %v200
    %v219 = vunpack.c.l.b16 %v180
    %v220 = vunpack.c.l.b16 %v181
    %v221 = vunpack.c.l.b16 %v182
    %v222 = vunpack.c.l.b16 %v183
    %v223 = vunpack.c.l.b16 %v184
    %v224 = vunpack.c.l.b16 %v185
    %v225 = vunpack.c.l.b16 %v186
    %v226 = vunpack.c.l.b16 %v187
    %v227 = vunpack.c.l.b16 %v188
    %v228 = vunpack.c.l.b16 %v189
    %v229 = vunpack.c.l.b16 %v190
    %v230 = vunpack.c.l.b16 %v191
    %v231 = vunpack.c.l.b16 %v192
    %v232 = vunpack.c.l.b16 %v193
    %v233 = vunpack.c.l.b16 %v194
    %v234 = vunpack.c.l.b16 %v195
    %v235 = vpack.c.b16 %v220, %v219
    %v236 = vpack.c.b16 %v222, %v221
    %v237 = vpack.c.b16 %v224, %v223
    %v238 = vpack.c.b16 %v226, %v225
    %v239 = vpack.c.b16 %v228, %v227
    %v240 = vpack.c.b16 %v230, %v229
    %v241 = vpack.c.b16 %v232, %v231
    %v242 = vpack.c.b16 %v234, %v233
    %251 = vmatprep.subr.bf16.mxu0 0
    %252 = vmatpush1.bf16.msra.mxu0 %v235
    %253 = vmatprep.subr.bf16.mxu0 0
    %254 = vmatpush1.bf16.msra.mxu0 %v236
    %255 = vmatprep.subr.bf16.mxu0 0
    %256 = vmatpush1.bf16.msra.mxu0 %v237
    %257 = vmatprep.subr.bf16.mxu0 0
    %258 = vmatpush1.bf16.msra.mxu0 %v238
    %259 = vmatprep.subr.bf16.mxu0 0
    %260 = vmatpush1.bf16.msra.mxu0 %v239
    %261 = vmatprep.subr.bf16.mxu0 0
    %262 = vmatpush1.bf16.msra.mxu0 %v240
    %263 = vmatprep.subr.bf16.mxu0 0
    %264 = vmatpush1.bf16.msra.mxu0 %v241
    %265 = vmatprep.subr.bf16.mxu0 0
    %266 = vmatpush1.bf16.msra.mxu0 %v242
    %267 = vmatprep.subr.bf16.mxu0 0
    %268 = vmatpush1.bf16.msra.mxu0 0
    %269 = vmatprep.subr.bf16.mxu0 0
    %270 = vmatpush1.bf16.msra.mxu0 0
    %271 = vmatprep.subr.bf16.mxu0 0
    %272 = vmatpush1.bf16.msra.mxu0 0
    %273 = vmatprep.subr.bf16.mxu0 0
    %274 = vmatpush1.bf16.msra.mxu0 0
    %275 = vmatprep.subr.bf16.mxu0 0
    %276 = vmatpush1.bf16.msra.mxu0 0
    %277 = vmatprep.subr.bf16.mxu0 0
    %278 = vmatpush1.bf16.msra.mxu0 0
    %279 = vmatprep.subr.bf16.mxu0 0
    %280 = vmatpush1.bf16.msra.mxu0 0
    %281 = vmatprep.subr.bf16.mxu0 0
    %282 = vmatpush1.bf16.msra.mxu0 0
    %283 = vmatprep.mubr.bf16.mxu0 0
    %284 = vmatmul.mubr.bf16.gmra.mrb[0].mxu0 %v179
    %v285 = vpop.f32.mrb[0].mxu0
    %v286 = vadd.f32 %v201, %v285
    %v287 = vpop.f32.mrb[0].mxu0
    %v288 = vpop.f32.mrb[0].mxu0
    %v289 = vadd.f32 %v201, %v288
    %v290 = vpop.f32.mrb[0].mxu0
    %291 = vdwg.mxu0
    %292 = vst [vmem:[#allocation8] sm:$0xff] %v286
    %293 = vst [vmem:[#allocation8 + $0x8] sm:$0xff] %v289
    // Predicated region
    $region34: #{tpu_custom_call.1} parent=1 // pred_check
      _
    $region35: #{tpu_custom_call.1} parent=1 // pred_check_branch
      %295 = sbr.rel (0) target = $region37
    $region36: #{tpu_custom_call.1} parent=1 // pred_region
      %s297 = ssub.s32 256, 256
      %298 = vsyncadd [#allocation4], %s297
      %s299 = sshll.u32 [#allocation8], 4
      %s300 = int_to_ptr.vmem [resolvable:$true] %s299
      %305 = dma.vmem_to_hbm [thread:$0]  %s300, 256, %s5, [#allocation4], 128, 128, 8
    $region37: #{tpu_custom_call.1} parent=1 // pred_fallthru
      _
    // Predicated region
    $region38: #{tpu_custom_call.1} parent=1 // pred_check
      _
    $region39: #{tpu_custom_call.1} parent=1 // pred_check_branch
      %307 = sbr.rel (0) target = $region41
    $region40: #{tpu_custom_call.1} parent=1 // pred_region
      %308 = dma.done [#allocation4], 256
    $region41: #{tpu_custom_call.1} parent=1 // pred_fallthru
      _
    %309 = vsyncpa [#allocation3], 1
    %310 = vsyncpa [#allocation6], 1
    %311 = vsyncpa [#allocation4], 1

</llo_original>
